<compile_context>
chip_gen: v7x
topology: tpu7x:2x2x1
jax: 0.10.0
libtpu: 0.0.40
codegen_flags: <defaults>
</compile_context>

<pallas_src>
import functools

import jax
import jax.numpy as jnp
from jax import lax
from jax.experimental import pallas as pl
from jax.experimental.pallas import tpu as pltpu


# --------------------------------------------------------------------------
# Pass 1: tiled |x| channel reduction -> (N, 1, T*V) float32
# --------------------------------------------------------------------------
def _abs_sum_kernel(x_ref, o_ref, *, c_total, c_blk, mask_tail):
    # x_ref: (1, c_blk, tv_blk) in x dtype; o_ref: (1, 1, tv_blk) f32
    # accumulator, resident across the channel (last, "arbitrary") grid axis.
    k = pl.program_id(2)

    @pl.when(k == 0)
    def _():
        o_ref[...] = jnp.zeros_like(o_ref)

    a = jnp.abs(x_ref[...]).astype(jnp.float32)
    if mask_tail:
        # cdiv grid: the last channel block may be padded.  Keep padded rows
        # out of the accumulator (padded T*V lanes are discarded on writeback
        # and need no masking).
        cidx = lax.broadcasted_iota(jnp.int32, a.shape, dimension=1)
        a = jnp.where(k * c_blk + cidx < c_total, a, 0.0)
    o_ref[...] += jnp.sum(a, axis=1, keepdims=True)


# --------------------------------------------------------------------------
# Pass 2: tiled broadcast multiply (renorm scale already folded into mask)
# --------------------------------------------------------------------------
def _apply_kernel(x_ref, m_ref, o_ref):
    # x_ref/o_ref: (1, c_blk, tv_blk); m_ref: (1, 1, tv_blk) in x dtype.
    o_ref[...] = x_ref[...] * m_ref[...]


# --------------------------------------------------------------------------
# Generation-aware tiling / VMEM budget
# --------------------------------------------------------------------------
def _vmem_limits():
    """Returns (scoped vmem limit bytes, per-tile budget bytes, hw capacity)."""
    try:
        cap = int(pltpu.get_tpu_info().vmem_capacity_bytes)
    except Exception:  # non-TPU backend / older runtime: be conservative
        cap = 64 * 1024 * 1024
    # Pass 2 double-buffers BOTH the x tile and the out tile (+ tiny mask),
    # so the live footprint is ~4x the tile; keep headroom below physical.
    vmem_limit = min((cap * 3) // 4, 96 * 1024 * 1024)  # ~48 MiB v7x, 96 MiB v5e/v6e
    tile_budget = vmem_limit // 6                       # ~8 MiB / ~16 MiB tiles
    return vmem_limit, tile_budget, cap


def _choose_blocks(n, c, tv, itemsize, tile_budget):
    """Pick (c_blk, tv_blk) obeying the (sublane, 128) layout rules.

    No divisor-of-C requirement: the grid uses cdiv and the abs-sum kernel
    masks the padded channel tail.  c_blk is rounded to the dtype's sublane
    packing so stores stay full-width.
    """
    pack = {4: 8, 2: 16, 1: 32}.get(itemsize, 8)
    elems = max(pack * 128, tile_budget // max(1, itemsize))
    # Lane (last) dim: multiple of 128, or the full T*V extent.
    if tv % 128 == 0:
        tv_blk = min(tv, max(128, (elems // pack) // 128 * 128))
        # Guarantee a >1 parallel extent for megacore (v7x) even when N == 1.
        if n == 1 and tv_blk == tv and tv >= 256:
            tv_blk = -(-(tv // 2) // 128) * 128
    else:
        tv_blk = tv
    # Sublane (second-minor) dim: multiple of `pack`, or the full C extent.
    cap = max(1, elems // tv_blk)
    c_blk = c if c <= cap else max(pack, (cap // pack) * pack)
    return c_blk, tv_blk


def dropblock_t_1d(x, key, keep_prob, *, block_size=7, training=True):
    """JAX/Pallas equivalent of DropBlockT_1d.forward(input, keep_prob)."""
    if (not training) or keep_prob == 1:
        return x
    assert block_size % 2 == 1, "odd block_size assumed (as in the torch module)"

    n, c, t, v = x.shape
    tv = t * v
    xr = x.reshape(n, c, tv)                   # contiguous -> free, lane-dense
    itemsize = jnp.dtype(x.dtype).itemsize

    vmem_limit, tile_budget, vmem_cap = _vmem_limits()
    c_blk, tv_blk = _choose_blocks(n, c, tv, itemsize, tile_budget)
    tile_bytes = c_blk * tv_blk * itemsize
    # Pathological shapes (tiny C, enormous un-splittable T*V) can exceed the
    # budget; raise the scoped limit as far as physically sensible.
    vmem_limit = max(vmem_limit,
                     min(4 * tile_bytes + (4 << 20), (vmem_cap * 9) // 10))

    c_grid = pl.cdiv(c, c_blk)
    tv_grid = pl.cdiv(tv, tv_blk)
    mask_tail = (c % c_blk) != 0

    # ---- pass 1: sum over channels of |x| (tiled, pipelined) -----------------
    abs_sum = pl.pallas_call(
        functools.partial(_abs_sum_kernel, c_total=c, c_blk=c_blk,
                          mask_tail=mask_tail),
        out_shape=jax.ShapeDtypeStruct((n, 1, tv), jnp.float32),
        grid=(n, tv_grid, c_grid),
        in_specs=[pl.BlockSpec((1, c_blk, tv_blk), lambda i, j, k: (i, k, j))],
        out_specs=pl.BlockSpec((1, 1, tv_blk), lambda i, j, k: (i, 0, j)),
        compiler_params=pltpu.CompilerParams(
            dimension_semantics=("parallel", "parallel", "arbitrary"),
            vmem_limit_bytes=vmem_limit),
    )(xr)

    # ---- tiny (N, T) mask computation (plain JAX; a few hundred elements) ----
    abs_mean = abs_sum.reshape(n, t, v).sum(axis=-1) / float(c * v)   # (N, T)
    total = jnp.sum(abs_mean)
    # eps-guard: all-zero input would give 0/0 = NaN in the torch reference.
    abs_norm = abs_mean * (float(n * t) / jnp.maximum(total, 1e-12))
    gamma = (1.0 - keep_prob) / block_size
    p = jnp.minimum(abs_norm * gamma, 1.0)

    m = jax.random.bernoulli(key, p).astype(jnp.float32)              # (N, T)

    # max_pool1d(kernel=block_size, stride=1, pad=block_size//2).
    # Zero-padding == -inf padding here because m >= 0 and (odd block_size)
    # every window contains at least one real element.
    pad = block_size // 2
    mp = jnp.pad(m, ((0, 0), (pad, pad)))
    msum = mp[:, 0:t]
    for k in range(1, block_size):
        msum = jnp.maximum(msum, mp[:, k:k + t])
    mask1d = 1.0 - msum                                               # (N, T)

    # mask.numel()/mask.sum() = (N*C*V*T)/(C*V*sum(mask1d)) = N*T/sum(mask1d).
    # Guard the (all-dropped) degenerate case that would NaN in torch.
    mask_sum = jnp.sum(mask1d)
    scale = float(n * t) / jnp.maximum(mask_sum, 1.0)

    # Fold the scale in, broadcast over V -> lane-dense (N, 1, T*V) in x dtype.
    mask_tv = jnp.repeat(mask1d * scale, v, axis=1).reshape(n, 1, tv)
    mask_tv = mask_tv.astype(x.dtype)

    # ---- pass 2: tiled apply (x * mask), broadcast over C and V, in place ----
    out = pl.pallas_call(
        _apply_kernel,
        out_shape=jax.ShapeDtypeStruct((n, c, tv), x.dtype),
        grid=(n, c_grid, tv_grid),
        in_specs=[pl.BlockSpec((1, c_blk, tv_blk), lambda i, j, k: (i, j, k)),
                  pl.BlockSpec((1, 1, tv_blk), lambda i, j, k: (i, 0, k))],
        out_specs=pl.BlockSpec((1, c_blk, tv_blk), lambda i, j, k: (i, j, k)),
        input_output_aliases={0: 0},
        compiler_params=pltpu.CompilerParams(
            dimension_semantics=("parallel", "parallel", "parallel"),
            vmem_limit_bytes=vmem_limit),
    )(xr, mask_tv)

    return out.reshape(n, c, t, v)


# --------------------------------------------------------------------------
# Pure-JAX reference (mirrors the torch module) for a correctness check.
# --------------------------------------------------------------------------
def _reference(x, keep_prob, key, block_size):
    n, c, t, v = x.shape
    xa = jnp.mean(jnp.mean(jnp.abs(x), axis=3), axis=1)
    xa = xa / jnp.maximum(jnp.sum(xa), 1e-12) * float(n * t)
    gamma = (1.0 - keep_prob) / block_size
    p = jnp.minimum(xa * gamma, 1.0)
    m = jax.random.bernoulli(key, p).astype(jnp.float32)
    pad = block_size // 2
    mp = jnp.pad(m, ((0, 0), (pad, pad)))
    ms = mp[:, 0:t]
    for k in range(1, block_size):
        ms = jnp.maximum(ms, mp[:, k:k + t])
    mask = 1.0 - ms
    scale = float(n * t) / jnp.maximum(jnp.sum(mask), 1.0)
    return (x * mask[:, None, :, None] * scale).astype(x.dtype)


if __name__ == "__main__":
    root = jax.random.PRNGKey(0)
    key_x, key_drop = jax.random.split(root)

    # (N, C, T, V) — small shapes consistent with the module's 4-D input.
    x = jax.random.normal(key_x, (2, 4, 16, 16), dtype=jnp.float32)
    x_shape, x_dtype = x.shape, x.dtype

    # Reference computed BEFORE the jitted call, which donates x (the pass-2
    # kernel writes the output in place via input_output_aliases).
    ref = _reference(x, 0.9, key_drop, 7)

    fwd = jax.jit(dropblock_t_1d,
                  static_argnames=("keep_prob", "block_size", "training"),
                  donate_argnums=(0,))
    out = fwd(x, key_drop, keep_prob=0.9, block_size=7, training=True)
    out = jax.block_until_ready(out)

    assert out.shape == x_shape and out.dtype == x_dtype
    assert bool(jnp.all(jnp.isfinite(out)))
    assert bool(jnp.allclose(out, ref, rtol=1e-4, atol=1e-5)), (
        float(jnp.max(jnp.abs(out - ref))))

    print("KERNEL_OK")
</pallas_src>

<mosaic_0001>
module attributes {stable_mosaic.version = 11 : i64} {
  func.func @_abs_sum_kernel(%arg0: i32, %arg1: i32, %arg2: i32, %arg3: memref<1x4x256xf32, #tpu.memory_space<vmem>>, %arg4: memref<1x1x256xf32, #tpu.memory_space<vmem>>) attributes {dimension_semantics = [#tpu.dimension_semantics<parallel>, #tpu.dimension_semantics<parallel>, #tpu.dimension_semantics<arbitrary>], iteration_bounds = array<i64: 2, 1, 1>, scalar_prefetch = 0 : i64, scratch_operands = 0 : i64, tpu.core_type = #tpu.core_type<tc>, window_params = [{transform_indices = @transform_0, window_bounds = array<i64: 1, 4, 256>}, {transform_indices = @transform_1, window_bounds = array<i64: 1, 1, 256>}]} {
    %c0_i32 = arith.constant 0 : i32
    %0 = arith.cmpi eq, %arg2, %c0_i32 : i32
    %1 = arith.extui %0 : i1 to i32
    %c0_i32_0 = arith.constant 0 : i32
    %2 = arith.cmpi ne, %1, %c0_i32_0 : i32
    scf.if %2 {
      %cst_9 = arith.constant 0.000000e+00 : f32
      %10 = vector.broadcast %cst_9 : f32 to vector<1x1x256xf32>
      %c0_10 = arith.constant 0 : index
      %c0_11 = arith.constant 0 : index
      %c0_12 = arith.constant 0 : index
      %11 = vector.load %arg4[%c0_10, %c0_11, %c0_12] : memref<1x1x256xf32, #tpu.memory_space<vmem>>, vector<1x1x256xf32>
      tpu.vector_store %arg4[%c0_10, %c0_11, %c0_12], %10 {strides = array<i32>} : memref<1x1x256xf32, #tpu.memory_space<vmem>>, vector<1x1x256xf32>,
    } else {
    }
    %c0 = arith.constant 0 : index
    %c0_1 = arith.constant 0 : index
    %c0_2 = arith.constant 0 : index
    %3 = vector.load %arg3[%c0, %c0_1, %c0_2] : memref<1x4x256xf32, #tpu.memory_space<vmem>>, vector<1x4x256xf32>
    %4 = math.absf %3 : vector<1x4x256xf32>
    %c0_3 = arith.constant 0 : index
    %c0_4 = arith.constant 0 : index
    %c0_5 = arith.constant 0 : index
    %5 = vector.load %arg4[%c0_3, %c0_4, %c0_5] : memref<1x1x256xf32, #tpu.memory_space<vmem>>, vector<1x1x256xf32>
    %cst = arith.constant dense<0.000000e+00> : vector<1x256xf32>
    %6 = vector.multi_reduction <add>, %4, %cst [1] : vector<1x4x256xf32> to vector<1x256xf32>
    %7 = vector.shape_cast %6 : vector<1x256xf32> to vector<1x1x256xf32>
    %8 = arith.addf %5, %7 : vector<1x1x256xf32>
    %c0_6 = arith.constant 0 : index
    %c0_7 = arith.constant 0 : index
    %c0_8 = arith.constant 0 : index
    %9 = vector.load %arg4[%c0_6, %c0_7, %c0_8] : memref<1x1x256xf32, #tpu.memory_space<vmem>>, vector<1x1x256xf32>
    tpu.vector_store %arg4[%c0_6, %c0_7, %c0_8], %8 {strides = array<i32>} : memref<1x1x256xf32, #tpu.memory_space<vmem>>, vector<1x1x256xf32>,
    return
  }
  func.func @transform_0(%arg0: i32, %arg1: i32, %arg2: i32) -> (i32, i32, i32) {
    %c0_i32 = arith.constant 0 : i32
    return %arg0, %arg2, %arg1 : i32, i32, i32
  }
  func.func @transform_1(%arg0: i32, %arg1: i32, %arg2: i32) -> (i32, i32, i32) {
    %c0_i32 = arith.constant 0 : i32
    %c0_i32_0 = arith.constant 0 : i32
    return %arg0, %c0_i32, %arg1 : i32, i32, i32
  }
}

module attributes {stable_mosaic.version = 11 : i64} {
  func.func @_apply_kernel(%arg0: i32, %arg1: i32, %arg2: i32, %arg3: memref<1x4x256xf32, #tpu.memory_space<vmem>>, %arg4: memref<1x1x256xf32, #tpu.memory_space<vmem>>, %arg5: memref<1x4x256xf32, #tpu.memory_space<vmem>>) attributes {dimension_semantics = [#tpu.dimension_semantics<parallel>, #tpu.dimension_semantics<parallel>, #tpu.dimension_semantics<parallel>], iteration_bounds = array<i64: 2, 1, 1>, scalar_prefetch = 0 : i64, scratch_operands = 0 : i64, tpu.core_type = #tpu.core_type<tc>, window_params = [{transform_indices = @transform_0, window_bounds = array<i64: 1, 4, 256>}, {transform_indices = @transform_1, window_bounds = array<i64: 1, 1, 256>}, {transform_indices = @transform_2, window_bounds = array<i64: 1, 4, 256>}]} {
    %c0 = arith.constant 0 : index
    %c0_0 = arith.constant 0 : index
    %c0_1 = arith.constant 0 : index
    %0 = vector.load %arg3[%c0, %c0_0, %c0_1] : memref<1x4x256xf32, #tpu.memory_space<vmem>>, vector<1x4x256xf32>
    %c0_2 = arith.constant 0 : index
    %c0_3 = arith.constant 0 : index
    %c0_4 = arith.constant 0 : index
    %1 = vector.load %arg4[%c0_2, %c0_3, %c0_4] : memref<1x1x256xf32, #tpu.memory_space<vmem>>, vector<1x1x256xf32>
    %2 = vector.broadcast %1 : vector<1x1x256xf32> to vector<1x4x256xf32>
    %3 = arith.mulf %0, %2 : vector<1x4x256xf32>
    %c0_5 = arith.constant 0 : index
    %c0_6 = arith.constant 0 : index
    %c0_7 = arith.constant 0 : index
    %4 = vector.load %arg5[%c0_5, %c0_6, %c0_7] : memref<1x4x256xf32, #tpu.memory_space<vmem>>, vector<1x4x256xf32>
    tpu.vector_store %arg5[%c0_5, %c0_6, %c0_7], %3 {strides = array<i32>} : memref<1x4x256xf32, #tpu.memory_space<vmem>>, vector<1x4x256xf32>,
    return
  }
  func.func @transform_0(%arg0: i32, %arg1: i32, %arg2: i32) -> (i32, i32, i32) {
    %c0_i32 = arith.constant 0 : i32
    return %arg0, %arg1, %arg2 : i32, i32, i32
  }
  func.func @transform_1(%arg0: i32, %arg1: i32, %arg2: i32) -> (i32, i32, i32) {
    %c0_i32 = arith.constant 0 : i32
    %c0_i32_0 = arith.constant 0 : i32
    return %arg0, %c0_i32, %arg2 : i32, i32, i32
  }
  func.func @transform_2(%arg0: i32, %arg1: i32, %arg2: i32) -> (i32, i32, i32) {
    %c0_i32 = arith.constant 0 : i32
    return %arg0, %arg1, %arg2 : i32, i32, i32
  }
}

</mosaic_0001>

<llo_original>
// kernel: dropblock_t_1d.2
$region0: #{dropblock_t_1d.2}
  #allocation0 [shape = 'u32[]', space=smem, size = 0x4, offset = 0x4, fixed_abs, tag = 'smem constant byte address 0x4 - core index']
  #allocation1 [shape = 'u32[144,128]{1,0:T(1,128)}', space=vmem, size = 0x12000, scoped, tag = 'internal scratch']
  %s0 = inlined_call_operand.vmem [shape: f32[2,4,256], index: 0, kind: input, shape index: {}]
  %s1 = inlined_call_operand.vmem [shape: f32[2,1,256], index: 1, kind: output, shape index: {}]
  %s2 = sld [smem:[#allocation0]]
  $region41: #{dropblock_t_1d.2} parent=0
    _
  %s4 = ssub.s32 1, %s2
  %s5 = scalar_select 0, %s4, %s2
  loop: start=0, step=1, limit=4
  $region2: #{dropblock_t_1d.2} parent=0 // loop_pre_header
    _
  $region3: #{dropblock_t_1d.2} parent=0 // loop_header
    %s7 = sphi 0, %s11
    %p8 = scmp.ge.s32.totalorder %s7, 4
    %s14 = sphi 0, %s33
    %s15 = sphi 0, %s29
    %s16 = sphi 0, %s25
    %s17 = sphi 0, %s14
    %s18 = sphi 0, %s15
    %s19 = sphi 0, %s16
    %s20 = sphi 0, %s17
    %s21 = sphi 0, %s18
    %s22 = sphi 0, %s19
    %s40 = sphi 0, %s42
    %s43 = sphi 0, %s40
    %s44 = sphi 0, %s43
    %s60 = sphi 0, %s44
    %s68 = sphi 0, %s70
    %s71 = sphi 0, %s68
    %s72 = sphi 0, %s71
    %s88 = sphi 0, %s72
  $region4: #{dropblock_t_1d.2} parent=0 // loop_header_branch
    %10 = sbr.rel (%p8) target = $region8
  $region5: #{dropblock_t_1d.2} parent=0 // loop_body
    %s12 = ssub.s32 %s7, 1
    %s13 = ssub.s32 %s7, 2
    %s23 = sadd.s32 1, %s16
    %p24 = scmp.ge.s32.totalorder %s23, 1
    %s25 = scalar_select %p24, 0, %s23
    %s26 = sadd.s32 1, %s15
    %s27 = scalar_select %p24, %s26, %s15
    %p28 = scmp.ge.s32.totalorder %s27, 1
    %s29 = scalar_select %p28, 0, %s27
    %s30 = sadd.s32 1, %s14
    %s31 = scalar_select %p28, %s30, %s14
    %p32 = scmp.ge.s32.totalorder %s31, 2
    %s33 = scalar_select %p32, 0, %s31
    %s34 = ssub.s32 %s14, %s33
    %s35 = ssub.s32 %s16, %s25
    %s36 = sor.u32 %s34, %s35
    %s37 = ssub.s32 %s15, %s29
    %s38 = sor.u32 %s36, %s37
    %p39 = scmp.eq.s32.totalorder %s38, 0
    %s41 = sadd.s32 %s40, 1
    %s42 = scalar_select %p39, %s40, %s41
    %p45 = pneg %p39
    %p46 = scmp.eq.s32.totalorder %s7, 1
    %p47 = por %p45, %p46
    %p48 = scmp.ne.s32.totalorder %s40, %s43
    %p49 = scmp.eq.s32.totalorder %s7, 0
    %p50 = por %p48, %p49
    %p51 = scmp.ne.s32.totalorder %s40, %s43
    %p52 = scmp.eq.s32.totalorder %s12, 1
    %p53 = por %p51, %p52
    %p54 = scmp.ne.s32.totalorder %s43, %s44
    %p55 = scmp.eq.s32.totalorder %s12, 0
    %p56 = por %p54, %p55
    %p57 = scmp.ne.s32.totalorder %s43, %s44
    %p58 = scmp.eq.s32.totalorder %s13, 1
    %p59 = por %p57, %p58
    %p61 = scmp.ne.s32.totalorder %s44, %s60
    %p62 = scmp.eq.s32.totalorder %s13, 0
    %p63 = por %p61, %p62
    %s64 = ssub.s32 %s14, %s33
    %s65 = ssub.s32 %s15, %s29
    %s66 = sor.u32 %s64, %s65
    %p67 = scmp.eq.s32.totalorder %s66, 0
    %s69 = sadd.s32 %s68, 1
    %s70 = scalar_select %p67, %s68, %s69
    %p73 = pneg %p67
    %p74 = scmp.eq.s32.totalorder %s7, 1
    %p75 = por %p73, %p74
    %p76 = scmp.ne.s32.totalorder %s68, %s71
    %p77 = scmp.eq.s32.totalorder %s7, 0
    %p78 = por %p76, %p77
    %p79 = scmp.ne.s32.totalorder %s68, %s71
    %p80 = scmp.eq.s32.totalorder %s12, 1
    %p81 = por %p79, %p80
    %p82 = scmp.ne.s32.totalorder %s71, %s72
    %p83 = scmp.eq.s32.totalorder %s12, 0
    %p84 = por %p82, %p83
    %p85 = scmp.ne.s32.totalorder %s71, %s72
    %p86 = scmp.eq.s32.totalorder %s13, 1
    %p87 = por %p85, %p86
    %p89 = scmp.ne.s32.totalorder %s72, %s88
    %p90 = scmp.eq.s32.totalorder %s13, 0
    %p91 = por %p89, %p90
    %p92 = scmp.le.s32.totalorder 1, %s7
    %p93 = scmp.lt.s32.totalorder %s7, 3
    %p94 = pnand %p92, %p93
    %p95 = pneg %p94
    // Predicated region
    $region9: #{dropblock_t_1d.2} parent=5 // pred_check
      _
    $region10: #{dropblock_t_1d.2} parent=5 // pred_check_branch
      %97 = sbr.rel (%p94) target = $region12
    $region11: #{dropblock_t_1d.2} parent=5 // pred_region
      %s98 = ssub.s32 %s7, 1
    $region12: #{dropblock_t_1d.2} parent=5 // pred_fallthru
      _
    %p99 = scmp.lt.s32.totalorder %s7, 2
    // Predicated region
    $region13: #{dropblock_t_1d.2} parent=5 // pred_check
      %p100 = pneg %p99
    $region14: #{dropblock_t_1d.2} parent=5 // pred_check_branch
      %102 = sbr.rel (%p100) target = $region16
    $region15: #{dropblock_t_1d.2} parent=5 // pred_region
      // Predicated region
      $region17: #{dropblock_t_1d.2} parent=15 // pred_check
        %p103 = pneg %p50
      $region18: #{dropblock_t_1d.2} parent=15 // pred_check_branch
        %105 = sbr.rel (%p103) target = $region20
      $region19: #{dropblock_t_1d.2} parent=15 // pred_region
        %s106 = smul.u32 2, %s15
        %p107 = scmp.lt.s32.totalorder %s14, 1
        %s108 = scalar_select %p107, %s14, 1
        %p109 = scmp.lt.s32.totalorder %s16, 0
        %s110 = scalar_select %p109, %s16, 0
        %p111 = scmp.lt.s32.totalorder %s106, 1
        %s112 = scalar_select %p111, %s106, 1
        %s113 = smul.addr %s110, 2
        %s114 = sadd.s32 %s112, %s113
        %s115 = smul.addr %s108, 2
        %s116 = sadd.s32 %s114, %s115
        %s117 = smul.addr %s116, 4
        %s118 = scalar_lea.vmem %s0, %s117
        %s119 = smul.u32 2, %s15
      $region20: #{dropblock_t_1d.2} parent=15 // pred_fallthru
        _
    $region16: #{dropblock_t_1d.2} parent=5 // pred_fallthru
      _
    %p120 = scmp.le.s32.totalorder 1, %s7
    %p121 = scmp.lt.s32.totalorder %s7, 3
    %p122 = pnand %p120, %p121
    %p123 = pneg %p122
    // Predicated region
    $region21: #{dropblock_t_1d.2} parent=5 // pred_check
      _
    $region22: #{dropblock_t_1d.2} parent=5 // pred_check_branch
      %125 = sbr.rel (%p122) target = $region24
    $region23: #{dropblock_t_1d.2} parent=5 // pred_region
      %s126 = ssub.s32 %s7, 1
      %s127 = smul.u32 2, %s18
      %p128 = scmp.lt.s32.totalorder %s17, 1
      %s129 = scalar_select %p128, %s17, 1
      %p130 = scmp.lt.s32.totalorder %s19, 0
      %s131 = scalar_select %p130, %s19, 0
      %p132 = scmp.lt.s32.totalorder %s127, 1
      %s133 = scalar_select %p132, %s127, 1
      %s134 = smul.addr %s131, 2
      %s135 = sadd.s32 %s133, %s134
      %s136 = smul.addr %s129, 2
      %s137 = sadd.s32 %s135, %s136
      %s138 = smul.addr %s137, 4
      %s139 = scalar_lea.vmem %s0, %s138
      %p140 = pneg %p56
      %p141 = pneg %p53
      %p142 = pneg %p84
      %p143 = pneg %p81
      %s144 = smul.u32 2, %s18
      %p145 = scmp.lt.s32.totalorder %s17, 1
      %s146 = scalar_select %p145, %s17, 1
      %p147 = scmp.lt.s32.totalorder %s144, 1
      %s148 = scalar_select %p147, %s144, 1
      %s149 = smul.addr %s146, 2
      %s150 = sadd.s32 %s148, %s149
      %s151 = scalar_lea.vmem %s1, %s150
      %s152 = smul.u32 2, %s18
      %p153 = scmp.lt.s32.totalorder %s17, 1
      %s154 = scalar_select %p153, %s17, 1
      %p155 = scmp.lt.s32.totalorder %s19, 0
      %s156 = scalar_select %p155, %s19, 0
      %p157 = scmp.lt.s32.totalorder %s152, 1
      %s158 = scalar_select %p157, %s152, 1
      %s159 = smul.addr %s156, 2
      %s160 = sadd.s32 %s158, %s159
      %s161 = smul.addr %s154, 2
      %s162 = sadd.s32 %s160, %s161
      %s163 = smul.addr %s162, 4
      %s164 = scalar_lea.vmem %s0, %s163
      %s165 = smul.u32 2, %s18
      %s166 = smul.u32 2, %s18
      %p167 = scmp.lt.s32.totalorder %s17, 1
      %s168 = scalar_select %p167, %s17, 1
      %p169 = scmp.lt.s32.totalorder %s166, 1
      %s170 = scalar_select %p169, %s166, 1
      %s171 = smul.addr %s168, 2
      %s172 = sadd.s32 %s170, %s171
      %s173 = scalar_lea.vmem %s1, %s172
      %s174 = smul.u32 2, %s18
      %p175 = scmp.eq.s32.totalorder %s19, 0
      // Predicated region
      $region25: #{dropblock_t_1d.2} parent=23 // pred_check
        %p176 = pneg %p175
      $region26: #{dropblock_t_1d.2} parent=23 // pred_check_branch
        %178 = sbr.rel (%p176) target = $region28
      $region27: #{dropblock_t_1d.2} parent=23 // pred_region
        %v179 = vlaneseq
        %vm180 = vcmp.ge.s32.totalorder %v179, 0
        %vm181 = vcmp.lt.s32.totalorder %v179, 256
        %vm182 = vmand %vm180, %vm181
        %183 = vst.msk [vmem:[%s173] sm:$0x3] %vm182, 0.0
      $region28: #{dropblock_t_1d.2} parent=23 // pred_fallthru
        _
      %v184 = vld [vmem:[%s164] sm:$0xff]
      %v185 = vand.u32 2147483647, %v184
      %v186 = vld [vmem:[%s173] sm:$0x3]
      %v188 = vcombine.high %v185, %v185
      %vm190 = vcmask 1043456
      %v191 = vsel %vm190, %v185, 0.0
      %v192 = vrot.slane %v191, 4
      %v193 = vadd.f32 %v191, %v192
      %v194 = vrot.slane %v193, 2
      %v195 = vadd.f32 %v193, %v194
      %v196 = vrot.slane %v195, 1
      %v197 = vadd.f32 %v195, %v196
      %v198 = vsel %vm190, %v188, 0.0
      %v199 = vrot.slane %v198, 4
      %v200 = vadd.f32 %v198, %v199
      %v201 = vrot.slane %v200, 2
      %v202 = vadd.f32 %v200, %v201
      %v203 = vrot.slane %v202, 1
      %v204 = vadd.f32 %v202, %v203
      %v207 = vcombine.low %v197, %v204
      %v209 = vunpack.c.l.s4 1966171168
      %v210 = vunpack.c.0.s8 %v209
      %v211 = vlaneseq
      %v212 = vshrl.u32 %v211, 7
      %v213 = vsub.s32 %v210, %v212
      %v214 = vrot.slane %v207, %v213
      %v216 = vunpack.c.l.s4 1966171168
      %v217 = vunpack.c.0.s8 %v216
      %v218 = vlaneseq
      %v219 = vshrl.u32 %v218, 7
      %v220 = vsub.s32 %v217, %v219
      %v221 = vrot.slane %v214, %v220
      %v223 = vadd.f32 %v186, %v221
      %v224 = vlaneseq
      %vm225 = vcmp.ge.s32.totalorder %v224, 0
      %vm226 = vcmp.lt.s32.totalorder %v224, 256
      %vm227 = vmand %vm225, %vm226
      %228 = vst.msk [vmem:[%s173] sm:$0x3] %vm227, %v223
      %s229 = smul.u32 2, %s18
      %p230 = scmp.lt.s32.totalorder %s17, 1
      %s231 = scalar_select %p230, %s17, 1
      %p232 = scmp.lt.s32.totalorder %s229, 1
      %s233 = scalar_select %p232, %s229, 1
      %s234 = smul.addr %s231, 2
      %s235 = sadd.s32 %s233, %s234
      %s236 = scalar_lea.vmem %s1, %s235
      // Predicated region
      $region29: #{dropblock_t_1d.2} parent=23 // pred_check
        %p237 = pneg %p81
      $region30: #{dropblock_t_1d.2} parent=23 // pred_check_branch
        %239 = sbr.rel (%p237) target = $region32
      $region31: #{dropblock_t_1d.2} parent=23 // pred_region
        %s240 = smul.u32 2, %s18
      $region32: #{dropblock_t_1d.2} parent=23 // pred_fallthru
        _
    $region24: #{dropblock_t_1d.2} parent=5 // pred_fallthru
      _
    %p241 = scmp.le.s32.totalorder 2, %s7
    // Predicated region
    $region33: #{dropblock_t_1d.2} parent=5 // pred_check
      %p242 = pneg %p241
    $region34: #{dropblock_t_1d.2} parent=5 // pred_check_branch
      %244 = sbr.rel (%p242) target = $region36
    $region35: #{dropblock_t_1d.2} parent=5 // pred_region
      %s245 = ssub.s32 %s7, 2
      // Predicated region
      $region37: #{dropblock_t_1d.2} parent=35 // pred_check
        %p246 = pneg %p87
      $region38: #{dropblock_t_1d.2} parent=35 // pred_check_branch
        %248 = sbr.rel (%p246) target = $region40
      $region39: #{dropblock_t_1d.2} parent=35 // pred_region
        %s249 = smul.u32 2, %s21
        %p250 = scmp.lt.s32.totalorder %s20, 1
        %s251 = scalar_select %p250, %s20, 1
        %p252 = scmp.lt.s32.totalorder %s249, 1
        %s253 = scalar_select %p252, %s249, 1
        %s254 = smul.addr %s251, 2
        %s255 = sadd.s32 %s253, %s254
        %s256 = scalar_lea.vmem %s1, %s255
      $region40: #{dropblock_t_1d.2} parent=35 // pred_fallthru
        _
    $region36: #{dropblock_t_1d.2} parent=5 // pred_fallthru
      _
  $region6: #{dropblock_t_1d.2} parent=0 // loop_footer
    %s11 = sadd.s32 1, %s7
  $region7: #{dropblock_t_1d.2} parent=0 // loop_footer_branch
    %6 = sbr.rel target = $region3
  $region8: #{dropblock_t_1d.2} parent=0 // loop_exit
    _

// kernel: dropblock_t_1d.3
$region0: #{dropblock_t_1d.3}
  #allocation0 [shape = 'u32[]', space=smem, size = 0x4, offset = 0x4, fixed_abs, tag = 'smem constant byte address 0x4 - core index']
  #allocation1 [shape = 'u32[144,128]{1,0:T(1,128)}', space=vmem, size = 0x12000, scoped, tag = 'internal scratch']
  %s0 = inlined_call_operand.vmem [shape: f32[2,4,256], index: 0, kind: input, shape index: {}, may-alias: {0,2}]
  %s1 = inlined_call_operand.vmem [shape: f32[2,1,256], index: 1, kind: input, shape index: {}]
  %s2 = inlined_call_operand.vmem [shape: f32[2,4,256], index: 2, kind: output, shape index: {}, may-alias: {0,2}]
  %s3 = sld [smem:[#allocation0]]
  $region41: #{dropblock_t_1d.3} parent=0
    _
  %s5 = ssub.s32 1, %s3
  %s6 = scalar_select 0, %s5, %s3
  loop: start=0, step=1, limit=4
  $region2: #{dropblock_t_1d.3} parent=0 // loop_pre_header
    _
  $region3: #{dropblock_t_1d.3} parent=0 // loop_header
    %s8 = sphi 0, %s12
    %p9 = scmp.ge.s32.totalorder %s8, 4
    %s15 = sphi 0, %s34
    %s16 = sphi 0, %s30
    %s17 = sphi 0, %s26
    %s18 = sphi 0, %s15
    %s19 = sphi 0, %s16
    %s20 = sphi 0, %s17
    %s21 = sphi 0, %s18
    %s22 = sphi 0, %s19
    %s23 = sphi 0, %s20
    %s41 = sphi 0, %s43
    %s44 = sphi 0, %s41
    %s45 = sphi 0, %s44
    %s61 = sphi 0, %s45
    %s69 = sphi 0, %s71
    %s72 = sphi 0, %s69
    %s73 = sphi 0, %s72
    %s89 = sphi 0, %s73
    %s99 = sphi 0, %s101
    %s102 = sphi 0, %s99
    %s103 = sphi 0, %s102
    %s119 = sphi 0, %s103
  $region4: #{dropblock_t_1d.3} parent=0 // loop_header_branch
    %11 = sbr.rel (%p9) target = $region8
  $region5: #{dropblock_t_1d.3} parent=0 // loop_body
    %s13 = ssub.s32 %s8, 1
    %s14 = ssub.s32 %s8, 2
    %s24 = sadd.s32 1, %s17
    %p25 = scmp.ge.s32.totalorder %s24, 1
    %s26 = scalar_select %p25, 0, %s24
    %s27 = sadd.s32 1, %s16
    %s28 = scalar_select %p25, %s27, %s16
    %p29 = scmp.ge.s32.totalorder %s28, 1
    %s30 = scalar_select %p29, 0, %s28
    %s31 = sadd.s32 1, %s15
    %s32 = scalar_select %p29, %s31, %s15
    %p33 = scmp.ge.s32.totalorder %s32, 2
    %s34 = scalar_select %p33, 0, %s32
    %s35 = ssub.s32 %s15, %s34
    %s36 = ssub.s32 %s16, %s30
    %s37 = sor.u32 %s35, %s36
    %s38 = ssub.s32 %s17, %s26
    %s39 = sor.u32 %s37, %s38
    %p40 = scmp.eq.s32.totalorder %s39, 0
    %s42 = sadd.s32 %s41, 1
    %s43 = scalar_select %p40, %s41, %s42
    %p46 = pneg %p40
    %p47 = scmp.eq.s32.totalorder %s8, 1
    %p48 = por %p46, %p47
    %p49 = scmp.ne.s32.totalorder %s41, %s44
    %p50 = scmp.eq.s32.totalorder %s8, 0
    %p51 = por %p49, %p50
    %p52 = scmp.ne.s32.totalorder %s41, %s44
    %p53 = scmp.eq.s32.totalorder %s13, 1
    %p54 = por %p52, %p53
    %p55 = scmp.ne.s32.totalorder %s44, %s45
    %p56 = scmp.eq.s32.totalorder %s13, 0
    %p57 = por %p55, %p56
    %p58 = scmp.ne.s32.totalorder %s44, %s45
    %p59 = scmp.eq.s32.totalorder %s14, 1
    %p60 = por %p58, %p59
    %p62 = scmp.ne.s32.totalorder %s45, %s61
    %p63 = scmp.eq.s32.totalorder %s14, 0
    %p64 = por %p62, %p63
    %s65 = ssub.s32 %s15, %s34
    %s66 = ssub.s32 %s17, %s26
    %s67 = sor.u32 %s65, %s66
    %p68 = scmp.eq.s32.totalorder %s67, 0
    %s70 = sadd.s32 %s69, 1
    %s71 = scalar_select %p68, %s69, %s70
    %p74 = pneg %p68
    %p75 = scmp.eq.s32.totalorder %s8, 1
    %p76 = por %p74, %p75
    %p77 = scmp.ne.s32.totalorder %s69, %s72
    %p78 = scmp.eq.s32.totalorder %s8, 0
    %p79 = por %p77, %p78
    %p80 = scmp.ne.s32.totalorder %s69, %s72
    %p81 = scmp.eq.s32.totalorder %s13, 1
    %p82 = por %p80, %p81
    %p83 = scmp.ne.s32.totalorder %s72, %s73
    %p84 = scmp.eq.s32.totalorder %s13, 0
    %p85 = por %p83, %p84
    %p86 = scmp.ne.s32.totalorder %s72, %s73
    %p87 = scmp.eq.s32.totalorder %s14, 1
    %p88 = por %p86, %p87
    %p90 = scmp.ne.s32.totalorder %s73, %s89
    %p91 = scmp.eq.s32.totalorder %s14, 0
    %p92 = por %p90, %p91
    %s93 = ssub.s32 %s15, %s34
    %s94 = ssub.s32 %s16, %s30
    %s95 = sor.u32 %s93, %s94
    %s96 = ssub.s32 %s17, %s26
    %s97 = sor.u32 %s95, %s96
    %p98 = scmp.eq.s32.totalorder %s97, 0
    %s100 = sadd.s32 %s99, 1
    %s101 = scalar_select %p98, %s99, %s100
    %p104 = pneg %p98
    %p105 = scmp.eq.s32.totalorder %s8, 1
    %p106 = por %p104, %p105
    %p107 = scmp.ne.s32.totalorder %s99, %s102
    %p108 = scmp.eq.s32.totalorder %s8, 0
    %p109 = por %p107, %p108
    %p110 = scmp.ne.s32.totalorder %s99, %s102
    %p111 = scmp.eq.s32.totalorder %s13, 1
    %p112 = por %p110, %p111
    %p113 = scmp.ne.s32.totalorder %s102, %s103
    %p114 = scmp.eq.s32.totalorder %s13, 0
    %p115 = por %p113, %p114
    %p116 = scmp.ne.s32.totalorder %s102, %s103
    %p117 = scmp.eq.s32.totalorder %s14, 1
    %p118 = por %p116, %p117
    %p120 = scmp.ne.s32.totalorder %s103, %s119
    %p121 = scmp.eq.s32.totalorder %s14, 0
    %p122 = por %p120, %p121
    %p123 = scmp.le.s32.totalorder 1, %s8
    %p124 = scmp.lt.s32.totalorder %s8, 3
    %p125 = pnand %p123, %p124
    %p126 = pneg %p125
    // Predicated region
    $region9: #{dropblock_t_1d.3} parent=5 // pred_check
      _
    $region10: #{dropblock_t_1d.3} parent=5 // pred_check_branch
      %128 = sbr.rel (%p125) target = $region12
    $region11: #{dropblock_t_1d.3} parent=5 // pred_region
      %s129 = ssub.s32 %s8, 1
    $region12: #{dropblock_t_1d.3} parent=5 // pred_fallthru
      _
    %p130 = scmp.lt.s32.totalorder %s8, 2
    // Predicated region
    $region13: #{dropblock_t_1d.3} parent=5 // pred_check
      %p131 = pneg %p130
    $region14: #{dropblock_t_1d.3} parent=5 // pred_check_branch
      %133 = sbr.rel (%p131) target = $region16
    $region15: #{dropblock_t_1d.3} parent=5 // pred_region
      // Predicated region
      $region17: #{dropblock_t_1d.3} parent=15 // pred_check
        %p134 = pneg %p51
      $region18: #{dropblock_t_1d.3} parent=15 // pred_check_branch
        %136 = sbr.rel (%p134) target = $region20
      $region19: #{dropblock_t_1d.3} parent=15 // pred_region
        %s137 = smul.u32 2, %s17
        %p138 = scmp.lt.s32.totalorder %s15, 1
        %s139 = scalar_select %p138, %s15, 1
        %p140 = scmp.lt.s32.totalorder %s16, 0
        %s141 = scalar_select %p140, %s16, 0
        %p142 = scmp.lt.s32.totalorder %s137, 1
        %s143 = scalar_select %p142, %s137, 1
        %s144 = smul.addr %s141, 2
        %s145 = sadd.s32 %s143, %s144
        %s146 = smul.addr %s139, 2
        %s147 = sadd.s32 %s145, %s146
        %s148 = smul.addr %s147, 4
        %s149 = scalar_lea.vmem %s0, %s148
        %s150 = smul.u32 2, %s17
      $region20: #{dropblock_t_1d.3} parent=15 // pred_fallthru
        _
      // Predicated region
      $region21: #{dropblock_t_1d.3} parent=15 // pred_check
        %p151 = pneg %p79
      $region22: #{dropblock_t_1d.3} parent=15 // pred_check_branch
        %153 = sbr.rel (%p151) target = $region24
      $region23: #{dropblock_t_1d.3} parent=15 // pred_region
        %s154 = smul.u32 2, %s17
        %p155 = scmp.lt.s32.totalorder %s15, 1
        %s156 = scalar_select %p155, %s15, 1
        %p157 = scmp.lt.s32.totalorder %s154, 1
        %s158 = scalar_select %p157, %s154, 1
        %s159 = smul.addr %s156, 2
        %s160 = sadd.s32 %s158, %s159
        %s161 = scalar_lea.vmem %s1, %s160
        %s162 = smul.u32 2, %s17
      $region24: #{dropblock_t_1d.3} parent=15 // pred_fallthru
        _
    $region16: #{dropblock_t_1d.3} parent=5 // pred_fallthru
      _
    %p163 = scmp.le.s32.totalorder 1, %s8
    %p164 = scmp.lt.s32.totalorder %s8, 3
    %p165 = pnand %p163, %p164
    %p166 = pneg %p165
    // Predicated region
    $region25: #{dropblock_t_1d.3} parent=5 // pred_check
      _
    $region26: #{dropblock_t_1d.3} parent=5 // pred_check_branch
      %168 = sbr.rel (%p165) target = $region28
    $region27: #{dropblock_t_1d.3} parent=5 // pred_region
      %s169 = ssub.s32 %s8, 1
      %s170 = smul.u32 2, %s20
      %p171 = scmp.lt.s32.totalorder %s18, 1
      %s172 = scalar_select %p171, %s18, 1
      %p173 = scmp.lt.s32.totalorder %s19, 0
      %s174 = scalar_select %p173, %s19, 0
      %p175 = scmp.lt.s32.totalorder %s170, 1
      %s176 = scalar_select %p175, %s170, 1
      %s177 = smul.addr %s174, 2
      %s178 = sadd.s32 %s176, %s177
      %s179 = smul.addr %s172, 2
      %s180 = sadd.s32 %s178, %s179
      %s181 = smul.addr %s180, 4
      %s182 = scalar_lea.vmem %s0, %s181
      %p183 = pneg %p57
      %p184 = pneg %p54
      %s185 = smul.u32 2, %s20
      %p186 = scmp.lt.s32.totalorder %s18, 1
      %s187 = scalar_select %p186, %s18, 1
      %p188 = scmp.lt.s32.totalorder %s185, 1
      %s189 = scalar_select %p188, %s185, 1
      %s190 = smul.addr %s187, 2
      %s191 = sadd.s32 %s189, %s190
      %s192 = scalar_lea.vmem %s1, %s191
      %p193 = pneg %p85
      %p194 = pneg %p82
      %p195 = pneg %p115
      %p196 = pneg %p112
      %s197 = smul.u32 2, %s20
      %p198 = scmp.lt.s32.totalorder %s18, 1
      %s199 = scalar_select %p198, %s18, 1
      %p200 = scmp.lt.s32.totalorder %s19, 0
      %s201 = scalar_select %p200, %s19, 0
      %p202 = scmp.lt.s32.totalorder %s197, 1
      %s203 = scalar_select %p202, %s197, 1
      %s204 = smul.addr %s201, 2
      %s205 = sadd.s32 %s203, %s204
      %s206 = smul.addr %s199, 2
      %s207 = sadd.s32 %s205, %s206
      %s208 = smul.addr %s207, 4
      %s209 = scalar_lea.vmem %s2, %s208
      %s210 = smul.u32 2, %s20
      %p211 = scmp.lt.s32.totalorder %s18, 1
      %s212 = scalar_select %p211, %s18, 1
      %p213 = scmp.lt.s32.totalorder %s19, 0
      %s214 = scalar_select %p213, %s19, 0
      %p215 = scmp.lt.s32.totalorder %s210, 1
      %s216 = scalar_select %p215, %s210, 1
      %s217 = smul.addr %s214, 2
      %s218 = sadd.s32 %s216, %s217
      %s219 = smul.addr %s212, 2
      %s220 = sadd.s32 %s218, %s219
      %s221 = smul.addr %s220, 4
      %s222 = scalar_lea.vmem %s0, %s221
      %s223 = smul.u32 2, %s20
      %s224 = smul.u32 2, %s20
      %p225 = scmp.lt.s32.totalorder %s18, 1
      %s226 = scalar_select %p225, %s18, 1
      %p227 = scmp.lt.s32.totalorder %s224, 1
      %s228 = scalar_select %p227, %s224, 1
      %s229 = smul.addr %s226, 2
      %s230 = sadd.s32 %s228, %s229
      %s231 = scalar_lea.vmem %s1, %s230
      %s232 = smul.u32 2, %s20
      %s233 = smul.u32 2, %s20
      %p234 = scmp.lt.s32.totalorder %s18, 1
      %s235 = scalar_select %p234, %s18, 1
      %p236 = scmp.lt.s32.totalorder %s19, 0
      %s237 = scalar_select %p236, %s19, 0
      %p238 = scmp.lt.s32.totalorder %s233, 1
      %s239 = scalar_select %p238, %s233, 1
      %s240 = smul.addr %s237, 2
      %s241 = sadd.s32 %s239, %s240
      %s242 = smul.addr %s235, 2
      %s243 = sadd.s32 %s241, %s242
      %s244 = smul.addr %s243, 4
      %s245 = scalar_lea.vmem %s2, %s244
      %s246 = smul.u32 2, %s20
      %v247 = vld [vmem:[%s222] sm:$0xff]
      %v248 = vld [vmem:[%s231] sm:$0x3]
      %v250 = vlaneseq
      %v251 = vshrl.u32 %v250, 7
      %v252 = vsub.s32 0, %v251
      %v253 = vrot.slane %v248, %v252
      %v254 = vlaneseq
      %v255 = vshrl.u32 %v254, 7
      %v256 = vsub.s32 1, %v255
      %v257 = vrot.slane %v248, %v256
      %v258 = vcombine.low %v253, %v257
      %v260 = vmul.f32 %v247, %v258
      %261 = vst [vmem:[%s245] sm:$0xff] %v260
      %s262 = smul.u32 2, %s20
      %p263 = scmp.lt.s32.totalorder %s18, 1
      %s264 = scalar_select %p263, %s18, 1
      %p265 = scmp.lt.s32.totalorder %s19, 0
      %s266 = scalar_select %p265, %s19, 0
      %p267 = scmp.lt.s32.totalorder %s262, 1
      %s268 = scalar_select %p267, %s262, 1
      %s269 = smul.addr %s266, 2
      %s270 = sadd.s32 %s268, %s269
      %s271 = smul.addr %s264, 2
      %s272 = sadd.s32 %s270, %s271
      %s273 = smul.addr %s272, 4
      %s274 = scalar_lea.vmem %s2, %s273
      // Predicated region
      $region29: #{dropblock_t_1d.3} parent=27 // pred_check
        %p275 = pneg %p112
      $region30: #{dropblock_t_1d.3} parent=27 // pred_check_branch
        %277 = sbr.rel (%p275) target = $region32
      $region31: #{dropblock_t_1d.3} parent=27 // pred_region
        %s278 = smul.u32 2, %s20
      $region32: #{dropblock_t_1d.3} parent=27 // pred_fallthru
        _
    $region28: #{dropblock_t_1d.3} parent=5 // pred_fallthru
      _
    %p279 = scmp.le.s32.totalorder 2, %s8
    // Predicated region
    $region33: #{dropblock_t_1d.3} parent=5 // pred_check
      %p280 = pneg %p279
    $region34: #{dropblock_t_1d.3} parent=5 // pred_check_branch
      %282 = sbr.rel (%p280) target = $region36
    $region35: #{dropblock_t_1d.3} parent=5 // pred_region
      %s283 = ssub.s32 %s8, 2
      // Predicated region
      $region37: #{dropblock_t_1d.3} parent=35 // pred_check
        %p284 = pneg %p118
      $region38: #{dropblock_t_1d.3} parent=35 // pred_check_branch
        %286 = sbr.rel (%p284) target = $region40
      $region39: #{dropblock_t_1d.3} parent=35 // pred_region
        %s287 = smul.u32 2, %s23
        %p288 = scmp.lt.s32.totalorder %s21, 1
        %s289 = scalar_select %p288, %s21, 1
        %p290 = scmp.lt.s32.totalorder %s22, 0
        %s291 = scalar_select %p290, %s22, 0
        %p292 = scmp.lt.s32.totalorder %s287, 1
        %s293 = scalar_select %p292, %s287, 1
        %s294 = smul.addr %s291, 2
        %s295 = sadd.s32 %s293, %s294
        %s296 = smul.addr %s289, 2
        %s297 = sadd.s32 %s295, %s296
        %s298 = smul.addr %s297, 4
        %s299 = scalar_lea.vmem %s2, %s298
      $region40: #{dropblock_t_1d.3} parent=35 // pred_fallthru
        _
    $region36: #{dropblock_t_1d.3} parent=5 // pred_fallthru
      _
  $region6: #{dropblock_t_1d.3} parent=0 // loop_footer
    %s12 = sadd.s32 1, %s8
  $region7: #{dropblock_t_1d.3} parent=0 // loop_footer_branch
    %7 = sbr.rel target = $region3
  $region8: #{dropblock_t_1d.3} parent=0 // loop_exit
    _

</llo_original>
